<compile_context>
chip_gen: v7x
topology: tpu7x:2x2x1
jax: 0.10.0
libtpu: 0.0.40
codegen_flags: <defaults>
</compile_context>

<pallas_src>
import jax
import jax.numpy as jnp
from jax.experimental import pallas as pl
from jax.experimental.pallas import tpu as pltpu


def _round_up(x, m):
    return ((x + m - 1) // m) * m


def _mlp_kernel(x_ref, w1_ref, b1_ref, w2_ref, b2_ref, o_ref):
    # fc_1: [tile_b, S] @ [S, H] — MXU, f32 accumulation (S=200 handled by
    # Mosaic without explicit padding since the block spans the full dim).
    h = jnp.dot(x_ref[...], w1_ref[...], preferred_element_type=jnp.float32)
    h = h + b1_ref[...]          # bias add (f32, VPU)
    h = jnp.maximum(h, 0.0)      # ReLU (f32, VPU)
    # fc_2: [tile_b, H] @ [H, A] — narrow-N matmul; kernel is DMA-bound so the
    # masked 16-lane store on the output is irrelevant.
    out = jnp.dot(h.astype(w2_ref.dtype), w2_ref[...],
                  preferred_element_type=jnp.float32)
    out = out + b2_ref[...]
    o_ref[...] = out.astype(o_ref.dtype)


def attr_choice_smorl_forward(state, w1, b1, w2, b2, *, tile_b=None):
    """Forward pass of Attr_choice_Smorl.

    state: [B, state_size] float32
    w1:    [state_size, 128]      (torch fc_1.weight, transposed)
    b1:    [128]
    w2:    [128, num_attributes]  (torch fc_2.weight, transposed)
    b2:    [num_attributes]
    """
    B, S = state.shape
    S_w, H = w1.shape
    H_w, A = w2.shape
    assert S_w == S and H_w == H and b1.shape == (H,) and b2.shape == (A,)
    out_dtype = state.dtype

    # ---- batch tiling: big tiles to amortize per-step overhead; no B padding.
    if tile_b is None:
        tile_b = 2048
    tile_b = _round_up(max(8, min(tile_b, B)), 8)
    grid_b = pl.cdiv(B, tile_b)   # last block may overrun; Pallas masks it.

    # Biases as [1, N] rows (tiny, VMEM-resident, broadcast inside kernel).
    b1_2d = b1.reshape(1, H).astype(jnp.float32)
    b2_2d = b2.reshape(1, A).astype(jnp.float32)

    out = pl.pallas_call(
        _mlp_kernel,
        out_shape=jax.ShapeDtypeStruct((B, A), out_dtype),
        grid_spec=pltpu.PrefetchScalarGridSpec(
            num_scalar_prefetch=0,
            grid=(grid_b,),
            in_specs=[
                # x: streamed batch tile at its true feature width.
                pl.BlockSpec((tile_b, S), lambda i: (i, 0)),
                # weights / biases: constant index_map -> VMEM-resident.
                pl.BlockSpec((S, H), lambda i: (0, 0)),
                pl.BlockSpec((1, H), lambda i: (0, 0)),
                pl.BlockSpec((H, A), lambda i: (0, 0)),
                pl.BlockSpec((1, A), lambda i: (0, 0)),
            ],
            out_specs=pl.BlockSpec((tile_b, A), lambda i: (i, 0)),
        ),
        compiler_params=pltpu.CompilerParams(
            dimension_semantics=("parallel",),       # batch tiles independent
            vmem_limit_bytes=32 * 1024 * 1024,       # explicit budget (v5e default 16 MiB)
        ),
    )(state, w1, b1_2d, w2, b2_2d)

    return out


def reference_forward(state, w1, b1, w2, b2):
    h = jnp.maximum(state @ w1 + b1, 0.0)
    return h @ w2 + b2


if __name__ == "__main__":
    # Shapes consistent with the module: state_size=200, hidden (fc_1) = 128,
    # num_attributes=16, small demo batch=8.
    batch = 8
    state_size = 200
    hidden = 128
    num_attributes = 16

    key = jax.random.PRNGKey(0)
    k_x, k_w1, k_b1, k_w2, k_b2, k_xl = jax.random.split(key, 6)

    state = jax.random.normal(k_x, (batch, state_size), dtype=jnp.float32)
    lim1 = 1.0 / (state_size ** 0.5)
    w1 = jax.random.uniform(k_w1, (state_size, hidden), minval=-lim1, maxval=lim1,
                            dtype=jnp.float32)
    b1 = jax.random.uniform(k_b1, (hidden,), minval=-lim1, maxval=lim1,
                            dtype=jnp.float32)
    lim2 = 1.0 / (hidden ** 0.5)
    w2 = jax.random.uniform(k_w2, (hidden, num_attributes), minval=-lim2, maxval=lim2,
                            dtype=jnp.float32)
    b2 = jax.random.uniform(k_b2, (num_attributes,), minval=-lim2, maxval=lim2,
                            dtype=jnp.float32)

    # 1) Small demo batch — exact f32 semantics, single grid step.
    out = attr_choice_smorl_forward(state, w1, b1, w2, b2)
    out = jax.block_until_ready(out)
    ref = reference_forward(state, w1, b1, w2, b2)
    assert out.shape == (batch, num_attributes)
    assert jnp.allclose(out, ref, atol=1e-5, rtol=1e-5)

    # 2) Larger, non-aligned batch with a small tile to exercise a multi-step
    #    grid and a partially covered final block (no B padding anywhere).
    big_b = 1030
    state_big = jax.random.normal(k_xl, (big_b, state_size), dtype=jnp.float32)
    out_big = attr_choice_smorl_forward(state_big, w1, b1, w2, b2, tile_b=512)
    out_big = jax.block_until_ready(out_big)
    ref_big = reference_forward(state_big, w1, b1, w2, b2)
    assert out_big.shape == (big_b, num_attributes)
    assert jnp.allclose(out_big, ref_big, atol=1e-4, rtol=1e-4)

    # 3) Default tile_b path on the larger batch (tile capped to round_up(B,8)).
    out_big2 = attr_choice_smorl_forward(state_big, w1, b1, w2, b2)
    out_big2 = jax.block_until_ready(out_big2)
    assert jnp.allclose(out_big2, ref_big, atol=1e-4, rtol=1e-4)

    print("KERNEL_OK")
</pallas_src>

<mosaic_0001>
module attributes {stable_mosaic.version = 11 : i64} {
  func.func @_mlp_kernel(%arg0: i32, %arg1: memref<8x200xf32, #tpu.memory_space<vmem>>, %arg2: memref<200x128xf32, #tpu.memory_space<vmem>>, %arg3: memref<1x128xf32, #tpu.memory_space<vmem>>, %arg4: memref<128x16xf32, #tpu.memory_space<vmem>>, %arg5: memref<1x16xf32, #tpu.memory_space<vmem>>, %arg6: memref<8x16xf32, #tpu.memory_space<vmem>>) attributes {dimension_semantics = [#tpu.dimension_semantics<parallel>], iteration_bounds = array<i64: 1>, scalar_prefetch = 0 : i64, scratch_operands = 0 : i64, tpu.core_type = #tpu.core_type<tc>, window_params = [{transform_indices = @transform_0, window_bounds = array<i64: 8, 200>}, {pipeline_mode = #tpu.pipeline_mode<synchronous>, transform_indices = @transform_1, window_bounds = array<i64: 200, 128>}, {pipeline_mode = #tpu.pipeline_mode<synchronous>, transform_indices = @transform_2, window_bounds = array<i64: 1, 128>}, {pipeline_mode = #tpu.pipeline_mode<synchronous>, transform_indices = @transform_3, window_bounds = array<i64: 128, 16>}, {pipeline_mode = #tpu.pipeline_mode<synchronous>, transform_indices = @transform_4, window_bounds = array<i64: 1, 16>}, {transform_indices = @transform_5, window_bounds = array<i64: 8, 16>}]} {
    %c0 = arith.constant 0 : index
    %c0_0 = arith.constant 0 : index
    %0 = vector.load %arg1[%c0, %c0_0] : memref<8x200xf32, #tpu.memory_space<vmem>>, vector<8x200xf32>
    %c0_1 = arith.constant 0 : index
    %c0_2 = arith.constant 0 : index
    %1 = vector.load %arg2[%c0_1, %c0_2] : memref<200x128xf32, #tpu.memory_space<vmem>>, vector<200x128xf32>
    %cst = arith.constant dense<0.000000e+00> : vector<8x128xf32>
    %2 = tpu.matmul %0, %1, %cst {dimension_numbers = #tpu.dot_dimension_numbers<[1], [0], [0], [1], [0, 0, 1, 1], [], []>} : vector<8x200xf32>, vector<200x128xf32>, vector<8x128xf32> -> vector<8x128xf32>
    %c0_3 = arith.constant 0 : index
    %c0_4 = arith.constant 0 : index
    %3 = vector.load %arg3[%c0_3, %c0_4] : memref<1x128xf32, #tpu.memory_space<vmem>>, vector<1x128xf32>
    %4 = vector.broadcast %3 : vector<1x128xf32> to vector<8x128xf32>
    %5 = arith.addf %2, %4 : vector<8x128xf32>
    %cst_5 = arith.constant 0.000000e+00 : f32
    %6 = vector.broadcast %cst_5 : f32 to vector<8x128xf32>
    %7 = arith.maximumf %5, %6 : vector<8x128xf32>
    %c0_6 = arith.constant 0 : index
    %c0_7 = arith.constant 0 : index
    %8 = vector.load %arg4[%c0_6, %c0_7] : memref<128x16xf32, #tpu.memory_space<vmem>>, vector<128x16xf32>
    %cst_8 = arith.constant dense<0.000000e+00> : vector<8x16xf32>
    %9 = tpu.matmul %7, %8, %cst_8 {dimension_numbers = #tpu.dot_dimension_numbers<[1], [0], [0], [1], [0, 0, 1, 1], [], []>} : vector<8x128xf32>, vector<128x16xf32>, vector<8x16xf32> -> vector<8x16xf32>
    %c0_9 = arith.constant 0 : index
    %c0_10 = arith.constant 0 : index
    %10 = vector.load %arg5[%c0_9, %c0_10] : memref<1x16xf32, #tpu.memory_space<vmem>>, vector<1x16xf32>
    %11 = vector.broadcast %10 : vector<1x16xf32> to vector<8x16xf32>
    %12 = arith.addf %9, %11 : vector<8x16xf32>
    %c0_11 = arith.constant 0 : index
    %c0_12 = arith.constant 0 : index
    %13 = vector.load %arg6[%c0_11, %c0_12] : memref<8x16xf32, #tpu.memory_space<vmem>>, vector<8x16xf32>
    tpu.vector_store %arg6[%c0_11, %c0_12], %12 {strides = array<i32>} : memref<8x16xf32, #tpu.memory_space<vmem>>, vector<8x16xf32>,
    return
  }
  func.func @transform_0(%arg0: i32) -> (i32, i32) {
    %c0_i32 = arith.constant 0 : i32
    %c0_i32_0 = arith.constant 0 : i32
    return %arg0, %c0_i32 : i32, i32
  }
  func.func @transform_1(%arg0: i32) -> (i32, i32) {
    %c0_i32 = arith.constant 0 : i32
    %c0_i32_0 = arith.constant 0 : i32
    %c0_i32_1 = arith.constant 0 : i32
    return %c0_i32, %c0_i32_0 : i32, i32
  }
  func.func @transform_2(%arg0: i32) -> (i32, i32) {
    %c0_i32 = arith.constant 0 : i32
    %c0_i32_0 = arith.constant 0 : i32
    %c0_i32_1 = arith.constant 0 : i32
    return %c0_i32, %c0_i32_0 : i32, i32
  }
  func.func @transform_3(%arg0: i32) -> (i32, i32) {
    %c0_i32 = arith.constant 0 : i32
    %c0_i32_0 = arith.constant 0 : i32
    %c0_i32_1 = arith.constant 0 : i32
    return %c0_i32, %c0_i32_0 : i32, i32
  }
  func.func @transform_4(%arg0: i32) -> (i32, i32) {
    %c0_i32 = arith.constant 0 : i32
    %c0_i32_0 = arith.constant 0 : i32
    %c0_i32_1 = arith.constant 0 : i32
    return %c0_i32, %c0_i32_0 : i32, i32
  }
  func.func @transform_5(%arg0: i32) -> (i32, i32) {
    %c0_i32 = arith.constant 0 : i32
    %c0_i32_0 = arith.constant 0 : i32
    return %arg0, %c0_i32 : i32, i32
  }
}

</mosaic_0001>

<llo_original>
// kernel: tpu_custom_call.1
$region0: #{tpu_custom_call.1}
  #allocation0 [shape = 'u32[]', space=smem, size = 0x4, offset = 0x4, fixed_abs, tag = 'smem constant byte address 0x4 - core index']
  #allocation1 [shape = 'u32[144,128]{1,0:T(1,128)}', space=vmem, size = 0x12000, scoped, tag = 'internal scratch']
  %s0 = inlined_call_operand.vmem [shape: f32[8,200], index: 0, kind: input, shape index: {}]
  %s1 = inlined_call_operand.hbm [shape: f32[200,128], index: 1, kind: input, shape index: {}]
  %s2 = inlined_call_operand.vmem [shape: f32[1,128], index: 2, kind: input, shape index: {}]
  %s3 = inlined_call_operand.vmem [shape: f32[128,16], index: 3, kind: input, shape index: {}]
  %s4 = inlined_call_operand.vmem [shape: f32[1,16], index: 4, kind: input, shape index: {}]
  %s5 = inlined_call_operand.hbm [shape: f32[8,16], index: 5, kind: output, shape index: {}]
  %s6 = sld [smem:[#allocation0]]
  $region34: #{tpu_custom_call.1} parent=0
    _
  %s8 = ssub.s32 1, %s6
  %s9 = scalar_select 0, %s8, %s6
  $region1: #{tpu_custom_call.1} parent=0
    #allocation2 [shape = 'u8[102400]{0}', space=vmem, size = 0x19000, scoped, tag = 'input window, operand 1, single buffered']
    #allocation3 [shape = 's32[1]{0}', space=sflag, size = 0x4, scoped, tag = 'scoped memory for tpu_custom_call.1']
    #allocation4 [shape = 's32[1]{0}', space=sflag, size = 0x4, scoped, tag = 'scoped memory for tpu_custom_call.1']
    #allocation5 [shape = 'u8[4096]{0}', space=vmem, size = 0x1000, scoped, tag = 'output window, operand 0, single buffered']
    %10 = vsyncpa [#allocation3], 0
    %11 = vsyncpa [#allocation4], 0
    // Predicated region
    $region2: #{tpu_custom_call.1} parent=1 // pred_check
      _
    $region3: #{tpu_custom_call.1} parent=1 // pred_check_branch
      %13 = sbr.rel (0) target = $region5
    $region4: #{tpu_custom_call.1} parent=1 // pred_region
      _
    $region5: #{tpu_custom_call.1} parent=1 // pred_fallthru
      _
    // Predicated region
    $region6: #{tpu_custom_call.1} parent=1 // pred_check
      _
    $region7: #{tpu_custom_call.1} parent=1 // pred_check_branch
      %15 = sbr.rel (0) target = $region9
    $region8: #{tpu_custom_call.1} parent=1 // pred_region
      %s17 = ssub.s32 3200, 3200
      %18 = vsyncadd [#allocation3], %s17
      %s19 = sshll.u32 [#allocation2], 4
      %s20 = int_to_ptr.vmem [resolvable:$true] %s19
      %25 = dma.hbm_to_vmem [thread:$0]  %s1, 3200, %s20, [#allocation3], 128, 128, 8
    $region9: #{tpu_custom_call.1} parent=1 // pred_fallthru
      _
    // Predicated region
    $region10: #{tpu_custom_call.1} parent=1 // pred_check
      _
    $region11: #{tpu_custom_call.1} parent=1 // pred_check_branch
      %27 = sbr.rel (0) target = $region13
    $region12: #{tpu_custom_call.1} parent=1 // pred_region
      _
    $region13: #{tpu_custom_call.1} parent=1 // pred_fallthru
      _
    // Predicated region
    $region14: #{tpu_custom_call.1} parent=1 // pred_check
      _
    $region15: #{tpu_custom_call.1} parent=1 // pred_check_branch
      %29 = sbr.rel (0) target = $region17
    $region16: #{tpu_custom_call.1} parent=1 // pred_region
      _
    $region17: #{tpu_custom_call.1} parent=1 // pred_fallthru
      _
    // Predicated region
    $region18: #{tpu_custom_call.1} parent=1 // pred_check
      _
    $region19: #{tpu_custom_call.1} parent=1 // pred_check_branch
      %31 = sbr.rel (0) target = $region21
    $region20: #{tpu_custom_call.1} parent=1 // pred_region
      _
    $region21: #{tpu_custom_call.1} parent=1 // pred_fallthru
      _
    // Predicated region
    $region22: #{tpu_custom_call.1} parent=1 // pred_check
      _
    $region23: #{tpu_custom_call.1} parent=1 // pred_check_branch
      %33 = sbr.rel (0) target = $region25
    $region24: #{tpu_custom_call.1} parent=1 // pred_region
      %34 = dma.done [#allocation3], 3200
    $region25: #{tpu_custom_call.1} parent=1 // pred_fallthru
      _
    %v35 = vld [vmem:[%s0] sm:$0xff]
    %v36 = vld [vmem:[%s0 + $0x8] sm:$0xff]
    %v37 = vld [vmem:[#allocation2] sm:$0xff]
    %v38 = vld [vmem:[#allocation2 + $0x8] sm:$0xff]
    %v39 = vld [vmem:[#allocation2 + $0x10] sm:$0xff]
    %v40 = vld [vmem:[#allocation2 + $0x18] sm:$0xff]
    %v41 = vld [vmem:[#allocation2 + $0x20] sm:$0xff]
    %v42 = vld [vmem:[#allocation2 + $0x28] sm:$0xff]
    %v43 = vld [vmem:[#allocation2 + $0x30] sm:$0xff]
    %v44 = vld [vmem:[#allocation2 + $0x38] sm:$0xff]
    %v45 = vld [vmem:[#allocation2 + $0x40] sm:$0xff]
    %v46 = vld [vmem:[#allocation2 + $0x48] sm:$0xff]
    %v47 = vld [vmem:[#allocation2 + $0x50] sm:$0xff]
    %v48 = vld [vmem:[#allocation2 + $0x58] sm:$0xff]
    %v49 = vld [vmem:[#allocation2 + $0x60] sm:$0xff]
    %v50 = vld [vmem:[#allocation2 + $0x68] sm:$0xff]
    %v51 = vld [vmem:[#allocation2 + $0x70] sm:$0xff]
    %v52 = vld [vmem:[#allocation2 + $0x78] sm:$0xff]
    %v53 = vld [vmem:[#allocation2 + $0x80] sm:$0xff]
    %v54 = vld [vmem:[#allocation2 + $0x88] sm:$0xff]
    %v55 = vld [vmem:[#allocation2 + $0x90] sm:$0xff]
    %v56 = vld [vmem:[#allocation2 + $0x98] sm:$0xff]
    %v57 = vld [vmem:[#allocation2 + $0xa0] sm:$0xff]
    %v58 = vld [vmem:[#allocation2 + $0xa8] sm:$0xff]
    %v59 = vld [vmem:[#allocation2 + $0xb0] sm:$0xff]
    %v60 = vld [vmem:[#allocation2 + $0xb8] sm:$0xff]
    %v61 = vld [vmem:[#allocation2 + $0xc0] sm:$0xff]
    %v62 = vld [vmem:[%s2] sm:$0x1]
    %v64 = vlaneseq
    %v65 = vshrl.u32 %v64, 7
    %v66 = vsub.s32 0, %v65
    %v67 = vrot.slane %v62, %v66
    %vm69 = vcmask 588800
    %v71 = vsel %vm69, %v36, 0
    %73 = vmatprep.subr.mxu0 0.0
    %74 = vmatpush1.msra.mxu0 %v37
    %75 = vmatprep.subr.mxu0 0.0
    %76 = vmatpush1.msra.mxu0 %v38
    %77 = vmatprep.subr.mxu0 0.0
    %78 = vmatpush1.msra.mxu0 %v39
    %79 = vmatprep.subr.mxu0 0.0
    %80 = vmatpush1.msra.mxu0 %v40
    %81 = vmatprep.subr.mxu0 0.0
    %82 = vmatpush1.msra.mxu0 %v41
    %83 = vmatprep.subr.mxu0 0.0
    %84 = vmatpush1.msra.mxu0 %v42
    %85 = vmatprep.subr.mxu0 0.0
    %86 = vmatpush1.msra.mxu0 %v43
    %87 = vmatprep.subr.mxu0 0.0
    %88 = vmatpush1.msra.mxu0 %v44
    %89 = vmatprep.subr.mxu0 0.0
    %90 = vmatpush1.msra.mxu0 %v45
    %91 = vmatprep.subr.mxu0 0.0
    %92 = vmatpush1.msra.mxu0 %v46
    %93 = vmatprep.subr.mxu0 0.0
    %94 = vmatpush1.msra.mxu0 %v47
    %95 = vmatprep.subr.mxu0 0.0
    %96 = vmatpush1.msra.mxu0 %v48
    %97 = vmatprep.subr.mxu0 0.0
    %98 = vmatpush1.msra.mxu0 %v49
    %99 = vmatprep.subr.mxu0 0.0
    %100 = vmatpush1.msra.mxu0 %v50
    %101 = vmatprep.subr.mxu0 0.0
    %102 = vmatpush1.msra.mxu0 %v51
    %103 = vmatprep.subr.mxu0 0.0
    %104 = vmatpush1.msra.mxu0 %v52
    %105 = vmatprep.subr.mxu0 0.0
    %106 = vmatpush1.msra.mxu0 %v53
    %107 = vmatprep.subr.mxu0 0.0
    %108 = vmatpush1.msra.mxu0 %v54
    %109 = vmatprep.subr.mxu0 0.0
    %110 = vmatpush1.msra.mxu0 %v55
    %111 = vmatprep.subr.mxu0 0.0
    %112 = vmatpush1.msra.mxu0 %v56
    %113 = vmatprep.subr.mxu0 0.0
    %114 = vmatpush1.msra.mxu0 %v57
    %115 = vmatprep.subr.mxu0 0.0
    %116 = vmatpush1.msra.mxu0 %v58
    %117 = vmatprep.subr.mxu0 0.0
    %118 = vmatpush1.msra.mxu0 %v59
    %119 = vmatprep.subr.mxu0 0.0
    %120 = vmatpush1.msra.mxu0 %v60
    %121 = vmatprep.subr.mxu0 0.0
    %122 = vmatpush1.msra.mxu0 %v61
    %123 = vmatprep.subr.mxu0 0.0
    %124 = vmatpush1.msra.mxu0 0.0
    %125 = vmatprep.subr.mxu0 0.0
    %126 = vmatpush1.msra.mxu0 0.0
    %127 = vmatprep.subr.mxu0 0.0
    %128 = vmatpush1.msra.mxu0 0.0
    %129 = vmatprep.subr.mxu0 0.0
    %130 = vmatpush1.msra.mxu0 0.0
    %131 = vmatprep.subr.mxu0 0.0
    %132 = vmatpush1.msra.mxu0 0.0
    %133 = vmatprep.subr.mxu0 0.0
    %134 = vmatpush1.msra.mxu0 0.0
    %135 = vmatprep.subr.mxu0 0.0
    %136 = vmatpush1.msra.mxu0 0.0
    %137 = vmatprep.mubr.f32.mxu0 %v71
    %138 = vmatmul.mubr.f32.gmra.mrb[0].mxu0 %v35
    %v139 = vpop.f32.mrb[0].mxu0
    %v140 = vadd.f32 %v67, %v139
    %v141 = vpop.f32.mrb[0].mxu0
    %142 = vdwg.mxu0
    %v143 = vmax.f32 %v140, 0.0
    %v144 = vld [vmem:[%s3] sm:$0xff]
    %v145 = vld [vmem:[%s3 + $0x8] sm:$0xff]
    %v146 = vld [vmem:[%s3 + $0x10] sm:$0xff]
    %v147 = vld [vmem:[%s3 + $0x18] sm:$0xff]
    %v148 = vld [vmem:[%s3 + $0x20] sm:$0xff]
    %v149 = vld [vmem:[%s3 + $0x28] sm:$0xff]
    %v150 = vld [vmem:[%s3 + $0x30] sm:$0xff]
    %v151 = vld [vmem:[%s3 + $0x38] sm:$0xff]
    %v152 = vld [vmem:[%s3 + $0x40] sm:$0xff]
    %v153 = vld [vmem:[%s3 + $0x48] sm:$0xff]
    %v154 = vld [vmem:[%s3 + $0x50] sm:$0xff]
    %v155 = vld [vmem:[%s3 + $0x58] sm:$0xff]
    %v156 = vld [vmem:[%s3 + $0x60] sm:$0xff]
    %v157 = vld [vmem:[%s3 + $0x68] sm:$0xff]
    %v158 = vld [vmem:[%s3 + $0x70] sm:$0xff]
    %v159 = vld [vmem:[%s3 + $0x78] sm:$0xff]
    %v160 = vld [vmem:[%s4] sm:$0x1]
    %v162 = vlaneseq
    %v163 = vshrl.u32 %v162, 7
    %v164 = vsub.s32 0, %v163
    %v165 = vrot.slane %v160, %v164
    %167 = vmatprep.subr.mxu0 0.0
    %168 = vmatpush1.msra.mxu0 %v144
    %169 = vmatprep.subr.mxu0 0.0
    %170 = vmatpush1.msra.mxu0 %v145
    %171 = vmatprep.subr.mxu0 0.0
    %172 = vmatpush1.msra.mxu0 %v146
    %173 = vmatprep.subr.mxu0 0.0
    %174 = vmatpush1.msra.mxu0 %v147
    %175 = vmatprep.subr.mxu0 0.0
    %176 = vmatpush1.msra.mxu0 %v148
    %177 = vmatprep.subr.mxu0 0.0
    %178 = vmatpush1.msra.mxu0 %v149
    %179 = vmatprep.subr.mxu0 0.0
    %180 = vmatpush1.msra.mxu0 %v150
    %181 = vmatprep.subr.mxu0 0.0
    %182 = vmatpush1.msra.mxu0 %v151
    %183 = vmatprep.subr.mxu0 0.0
    %184 = vmatpush1.msra.mxu0 %v152
    %185 = vmatprep.subr.mxu0 0.0
    %186 = vmatpush1.msra.mxu0 %v153
    %187 = vmatprep.subr.mxu0 0.0
    %188 = vmatpush1.msra.mxu0 %v154
    %189 = vmatprep.subr.mxu0 0.0
    %190 = vmatpush1.msra.mxu0 %v155
    %191 = vmatprep.subr.mxu0 0.0
    %192 = vmatpush1.msra.mxu0 %v156
    %193 = vmatprep.subr.mxu0 0.0
    %194 = vmatpush1.msra.mxu0 %v157
    %195 = vmatprep.subr.mxu0 0.0
    %196 = vmatpush1.msra.mxu0 %v158
    %197 = vmatprep.subr.mxu0 0.0
    %198 = vmatpush1.msra.mxu0 %v159
    %199 = vmatprep.subr.mxu0 0.0
    %200 = vmatpush1.msra.mxu0 0.0
    %201 = vmatprep.subr.mxu0 0.0
    %202 = vmatpush1.msra.mxu0 0.0
    %203 = vmatprep.subr.mxu0 0.0
    %204 = vmatpush1.msra.mxu0 0.0
    %205 = vmatprep.subr.mxu0 0.0
    %206 = vmatpush1.msra.mxu0 0.0
    %207 = vmatprep.subr.mxu0 0.0
    %208 = vmatpush1.msra.mxu0 0.0
    %209 = vmatprep.subr.mxu0 0.0
    %210 = vmatpush1.msra.mxu0 0.0
    %211 = vmatprep.subr.mxu0 0.0
    %212 = vmatpush1.msra.mxu0 0.0
    %213 = vmatprep.subr.mxu0 0.0
    %214 = vmatpush1.msra.mxu0 0.0
    %215 = vmatprep.subr.mxu0 0.0
    %216 = vmatpush1.msra.mxu0 0.0
    %217 = vmatprep.subr.mxu0 0.0
    %218 = vmatpush1.msra.mxu0 0.0
    %219 = vmatprep.subr.mxu0 0.0
    %220 = vmatpush1.msra.mxu0 0.0
    %221 = vmatprep.subr.mxu0 0.0
    %222 = vmatpush1.msra.mxu0 0.0
    %223 = vmatprep.subr.mxu0 0.0
    %224 = vmatpush1.msra.mxu0 0.0
    %225 = vmatprep.subr.mxu0 0.0
    %226 = vmatpush1.msra.mxu0 0.0
    %227 = vmatprep.subr.mxu0 0.0
    %228 = vmatpush1.msra.mxu0 0.0
    %229 = vmatprep.subr.mxu0 0.0
    %230 = vmatpush1.msra.mxu0 0.0
    %231 = vmatprep.mubr.f32.mxu0 0.0
    %232 = vmatmul.mubr.f32.gmra.mrb[0].mxu0 %v143
    %v233 = vpop.f32.mrb[0].mxu0
    %v234 = vadd.f32 %v165, %v233
    %v235 = vpop.f32.mrb[0].mxu0
    %236 = vdwg.mxu0
    %vm237 = vcmask 130048
    %238 = vst.msk [vmem:[#allocation5] sm:$0xff] %vm237, %v234
    // Predicated region
    $region26: #{tpu_custom_call.1} parent=1 // pred_check
      _
    $region27: #{tpu_custom_call.1} parent=1 // pred_check_branch
      %240 = sbr.rel (0) target = $region29
    $region28: #{tpu_custom_call.1} parent=1 // pred_region
      %s242 = ssub.s32 128, 128
      %243 = vsyncadd [#allocation4], %s242
      %s245 = sshll.u32 [#allocation5], 4
      %s246 = int_to_ptr.vmem [resolvable:$true] %s245
      %248 = dma.vmem_to_hbm [thread:$0]  %s246, 128, %s5, [#allocation4]
    $region29: #{tpu_custom_call.1} parent=1 // pred_fallthru
      _
    // Predicated region
    $region30: #{tpu_custom_call.1} parent=1 // pred_check
      _
    $region31: #{tpu_custom_call.1} parent=1 // pred_check_branch
      %250 = sbr.rel (0) target = $region33
    $region32: #{tpu_custom_call.1} parent=1 // pred_region
      %251 = dma.done [#allocation4], 128
    $region33: #{tpu_custom_call.1} parent=1 // pred_fallthru
      _
    %252 = vsyncpa [#allocation3], 1
    %253 = vsyncpa [#allocation4], 1

</llo_original>
